<compile_context>
chip_gen: v7x
topology: tpu7x:2x2x1
jax: 0.10.0
libtpu: 0.0.40
codegen_flags: <defaults>
</compile_context>

<pallas_src>
import functools

import jax
import jax.numpy as jnp
from jax.experimental import pallas as pl
from jax.experimental.pallas import tpu as pltpu


def attr_encoder_kernel(idx_ref, ev_ref, mask_ref, i_ref, tab_ref,
                        w2a_ref, w2at_ref, w2bsum_ref, b2_ref, out_ref,
                        *, seq_valid):
    """One batch tile (TB entities) per grid step.

    idx_ref    : (TB, Lp) int32   attribute ids (gathered in-kernel)
    ev_ref     : (TB, Lp) f32     raw attribute values
    mask_ref   : (TB, Lp) f32     attention mask (multiplies logits, as in torch)
    i_ref      : (TB, D)  bf16    image / query vectors
    tab_ref    : (V, D)   bf16    fc1-projected attribute table (VMEM resident)
    w2a_ref    : (D, D)   bf16    W2[:D]
    w2at_ref   : (D, D)   bf16    W2[:D]^T
    w2bsum_ref : (1, D)   f32     column sums of W2[D:]
    b2_ref     : (1, D)   f32     fc2 bias
    out_ref    : (TB, D)  f32
    """
    tb, seq = idx_ref.shape
    vocab, dim = tab_ref.shape
    f32 = jnp.float32

    idx = idx_ref[...]                                      # (TB, Lp) int32
    v = jax.nn.sigmoid(ev_ref[...])                         # (TB, Lp) f32
    msk = mask_ref[...]                                     # (TB, Lp) f32
    ivec_bf = i_ref[...]                                    # (TB, D)  bf16
    ivec = ivec_bf.astype(f32)                              # exact upcast (VPU math in f32)

    # ---- in-kernel gather: ea = one_hot(idx) @ proj_table (exact for 0/1) ---
    iota_v = jax.lax.broadcasted_iota(jnp.int32, (tb, seq, vocab), 2)
    onehot = (idx[..., None] == iota_v).astype(f32)         # (TB, Lp, V)
    onehot2d = onehot.reshape(tb * seq, vocab).astype(tab_ref.dtype)  # free view (Lp % 8 == 0)
    ea = jnp.dot(onehot2d, tab_ref[...],
                 preferred_element_type=f32)                # (TB*Lp, D) f32
    ea = ea.reshape(tb, seq, dim)                           # free view

    # ---- scores without materializing e = (TB, Lp, D) -----------------------
    #   e     = ea @ W2a + sigmoid(v) * colsum(W2b) + b2
    #   score = (e . i) * mask
    #         = (ea . (i @ W2a^T) + sigmoid(v)*(colsum . i) + (b2 . i)) * mask
    u = jnp.dot(ivec_bf, w2at_ref[...], preferred_element_type=f32)      # (TB, D)
    s_colsum = jnp.sum(ivec * w2bsum_ref[...], axis=-1, keepdims=True)   # (TB, 1)
    s_b2 = jnp.sum(ivec * b2_ref[...], axis=-1, keepdims=True)           # (TB, 1)
    scores = (jnp.sum(ea * u[:, None, :], axis=-1)
              + v * s_colsum + s_b2) * msk                               # (TB, Lp)

    if seq_valid < seq:   # static branch: padded attr slots drop out of softmax
        lpos = jax.lax.broadcasted_iota(jnp.int32, (tb, seq), 1)
        scores = jnp.where(lpos < seq_valid, scores, -1e30)

    # alpha = softmax_L(scores); approximate reciprocal runs on the EUP slot.
    m = jnp.max(scores, axis=-1, keepdims=True)
    p = jnp.exp(scores - m)
    alpha = p * pl.reciprocal(jnp.sum(p, axis=-1, keepdims=True), approx=True)

    # ---- pool first, project once -------------------------------------------
    #   out = (sum_L alpha*ea) @ W2a + (sum_L alpha*sigmoid(v)) * colsum + b2
    #   (sum_L alpha == 1, so the bias survives exactly)
    pooled_ea = jnp.sum(alpha[..., None] * ea, axis=1)                   # (TB, D)
    pooled_v = jnp.sum(alpha * v, axis=-1, keepdims=True)                # (TB, 1)
    out = (jnp.dot(pooled_ea.astype(w2a_ref.dtype), w2a_ref[...],
                   preferred_element_type=f32)
           + pooled_v * w2bsum_ref[...] + b2_ref[...])
    out_ref[...] = out.astype(out_ref.dtype)


def _choose_batch_tile(batch):
    """Sublane-aligned (multiple-of-8) batch tile.

    256 entities/step (~2K gather-matmul rows at L=8) keeps per-step compute
    well above the ~0.35 us grid-step overhead while the f32 intermediates
    (one-hot, (TB, Lp, D) products) stay a few MiB -- comfortably inside v7x's
    32 MiB scoped VMEM.  When the batch allows it, the tile is capped so the
    grid has >= 2 steps and both v7x TensorCores get work.
    """
    bp8 = -(-batch // 8) * 8
    tb = min(256, bp8)
    if batch >= 16 and 2 * tb > bp8:
        tb = -(-(bp8 // 2) // 8) * 8
    return max(tb, 8)


def precompute_attr_proj_table(attr_table, w1, b1, table_dtype=jnp.bfloat16):
    """Fold fc1 into the frozen pretrained embedding table (call ONCE):
         attr_embed(idx) @ W1 + b1  ==  gather(attr_table @ W1 + b1)[idx]
    Stored in bf16: the in-kernel one-hot gather reproduces the bf16 rows
    exactly, and bf16 halves the table's VMEM footprint (v7x budget)."""
    proj = (attr_table.astype(jnp.float32) @ w1.astype(jnp.float32)
            + b1.reshape(1, -1).astype(jnp.float32))
    return proj.astype(table_dtype)


@jax.jit
def attr_encoder_forward(e_a_idx, e_v, mask, i_vec, proj_table, w2, b2):
    """JAX wrapper reproducing AttrEncoder.forward (torch arg `l` is unused)."""
    B, L = e_a_idx.shape
    V, D = proj_table.shape
    f32 = jnp.float32

    # fc2 split (kills the lane-dim concat and halves fc2's weight matrix):
    #   cat([e_a, sig(v)*1_D]) @ W2 == e_a @ W2[:D] + sig(v) (x) colsum(W2[D:])
    w2f = w2.astype(f32)
    w2a = w2f[:D].astype(jnp.bfloat16)                      # (D, D)
    w2at = w2f[:D].T.astype(jnp.bfloat16)                   # (D, D)  for u = i @ W2a^T
    w2b_colsum = jnp.sum(w2f[D:], axis=0, keepdims=True)    # (1, D)  f32
    b2r = b2.reshape(1, D).astype(f32)

    idx = e_a_idx.astype(jnp.int32)
    ev2 = e_v.astype(f32)
    mask2 = mask.astype(f32)
    iv = i_vec.astype(jnp.bfloat16)                         # bf16 stream (exact f32 upcast in-kernel)

    # Pad L to a sublane multiple so in-kernel reshapes stay free views.
    Lp = -(-L // 8) * 8
    if Lp != L:
        idx = jnp.pad(idx, ((0, 0), (0, Lp - L)))
        ev2 = jnp.pad(ev2, ((0, 0), (0, Lp - L)))
        mask2 = jnp.pad(mask2, ((0, 0), (0, Lp - L)))

    # Batch tiling (padded rows use id 0 / mask 0 and are sliced off below).
    TB = _choose_batch_tile(B)
    Bp = -(-B // TB) * TB
    if Bp != B:
        pad = Bp - B
        idx = jnp.pad(idx, ((0, pad), (0, 0)))
        ev2 = jnp.pad(ev2, ((0, pad), (0, 0)))
        mask2 = jnp.pad(mask2, ((0, pad), (0, 0)))
        iv = jnp.pad(iv, ((0, pad), (0, 0)))

    kernel = functools.partial(attr_encoder_kernel, seq_valid=L)
    out = pl.pallas_call(
        kernel,
        out_shape=jax.ShapeDtypeStruct((Bp, D), f32),
        grid_spec=pltpu.PrefetchScalarGridSpec(
            num_scalar_prefetch=0,
            grid=(Bp // TB,),
            in_specs=[
                pl.BlockSpec((TB, Lp), lambda b: (b, 0)),   # attr ids (int32)
                pl.BlockSpec((TB, Lp), lambda b: (b, 0)),   # attr values
                pl.BlockSpec((TB, Lp), lambda b: (b, 0)),   # mask
                pl.BlockSpec((TB, D),  lambda b: (b, 0)),   # i (bf16)
                pl.BlockSpec((V, D),   lambda b: (0, 0)),   # proj table (bf16, fetched once)
                pl.BlockSpec((D, D),   lambda b: (0, 0)),   # W2[:D]
                pl.BlockSpec((D, D),   lambda b: (0, 0)),   # W2[:D]^T
                pl.BlockSpec((1, D),   lambda b: (0, 0)),   # colsum(W2[D:])
                pl.BlockSpec((1, D),   lambda b: (0, 0)),   # b2
            ],
            # Output block spans the full last dim -> contiguous HBM write DMA.
            out_specs=pl.BlockSpec((TB, D), lambda b: (b, 0)),
        ),
        compiler_params=pltpu.CompilerParams(
            dimension_semantics=("parallel",),
            vmem_limit_bytes=32 * 1024 * 1024),   # explicit cap: safe on v5e/v6e/v7x
    )(idx, ev2, mask2, iv, proj_table, w2a, w2at, w2b_colsum, b2r)
    return out[:B]                                          # (B, D)


# ----------------------------- references -----------------------------------
def _reference_f32(e_a_idx, e_v, mask, i_vec, attr_table, w1, b1, w2, b2):
    """Pure-f32 JAX mirror of the PyTorch AttrEncoder.forward."""
    D = w1.shape[1]
    e_a = jnp.take(attr_table, e_a_idx, axis=0) @ w1 + b1
    v = jax.nn.sigmoid(e_v)[..., None] * jnp.ones((D,), jnp.float32)
    e = jnp.concatenate([e_a, v], axis=2) @ w2 + b2
    scores = jnp.sum(e * i_vec[:, None, :], axis=-1) * mask
    alpha = jax.nn.softmax(scores, axis=1)
    return jnp.sum(alpha[..., None] * e, axis=1)


def _reference_matched_precision(e_a_idx, e_v, mask, i_vec, proj_table, w2, b2):
    """Torch-algebra reference with the kernel's quantization policy applied
    (fc1 output = bf16 proj_table rows, W2[:D] and i in bf16, math in f32).
    Isolates the kernel's algebraic refactor from deliberate bf16 storage."""
    D = w2.shape[1]
    q = lambda x: x.astype(jnp.bfloat16).astype(jnp.float32)
    e_a = jnp.take(proj_table.astype(jnp.float32), e_a_idx, axis=0)
    v = jax.nn.sigmoid(e_v)[..., None] * jnp.ones((D,), jnp.float32)
    w2q = jnp.concatenate([q(w2[:D]), w2[D:]], axis=0)
    e = jnp.concatenate([e_a, v], axis=2) @ w2q + b2
    scores = jnp.sum(e * q(i_vec)[:, None, :], axis=-1) * mask
    alpha = jax.nn.softmax(scores, axis=1)
    return jnp.sum(alpha[..., None] * e, axis=1)


if __name__ == "__main__":
    # Small deterministic shapes consistent with the module.
    B, L, D = 2, 8, 32          # batch, num attrs per entity, args.dim
    NUM_ATTRS, EMB = 16, 768    # attr vocabulary, pretrained embedding width

    key = jax.random.PRNGKey(0)
    k_tab, k_idx, k_v, k_m, k_i, k_w1, k_b1, k_w2, k_b2 = jax.random.split(key, 9)

    # Pretrained attribute embedding table (kgs.attr_list), synthetic.
    attr_table = jax.random.normal(k_tab, (NUM_ATTRS, EMB), jnp.float32)

    # Parameters: xavier_normal_ weights (stored (in, out)), default nn.Linear biases.
    std1 = (2.0 / (EMB + D)) ** 0.5
    std2 = (2.0 / (2 * D + D)) ** 0.5
    w1 = std1 * jax.random.normal(k_w1, (EMB, D), jnp.float32)
    b1 = jax.random.uniform(k_b1, (D,), jnp.float32, -EMB ** -0.5, EMB ** -0.5)
    w2 = std2 * jax.random.normal(k_w2, (2 * D, D), jnp.float32)
    b2 = jax.random.uniform(k_b2, (D,), jnp.float32,
                            -(2 * D) ** -0.5, (2 * D) ** -0.5)

    # Inputs (torch forward's `l` argument is unused and omitted).
    e_a_idx = jax.random.randint(k_idx, (B, L), 0, NUM_ATTRS)
    e_v = jax.random.normal(k_v, (B, L), jnp.float32)
    mask = (jax.random.uniform(k_m, (B, L)) > 0.3).astype(jnp.float32)
    i_vec = jax.random.normal(k_i, (B, D), jnp.float32)

    # fc1 folded into the frozen embedding table ONCE, outside the jitted forward.
    proj_table = precompute_attr_proj_table(attr_table, w1, b1)

    out = attr_encoder_forward(e_a_idx, e_v, mask, i_vec, proj_table, w2, b2)
    out = jax.block_until_ready(out)
    assert out.shape == (B, D)

    ref_match = _reference_matched_precision(e_a_idx, e_v, mask, i_vec,
                                             proj_table, w2, b2)
    ref_f32 = _reference_f32(e_a_idx, e_v, mask, i_vec,
                             attr_table, w1, b1, w2, b2)

    # Tight check vs the matched-precision reference: validates the refactored
    # gather / split-fc2 / score / pooling algebra; slack covers the approx EUP
    # reciprocal and the bf16 cast before the final (TB,D)x(D,D) projection.
    assert jnp.allclose(out, ref_match, atol=1e-2, rtol=1e-2), \
        "mismatch vs matched-precision reference"
    # Loose check vs the pure-f32 torch mirror: slack covers the deliberate
    # bf16 storage of proj_table / W2[:D] / i.
    assert jnp.allclose(out, ref_f32, atol=5e-2, rtol=5e-2), \
        "mismatch vs f32 reference"

    print("KERNEL_OK")
</pallas_src>

<mosaic_0001>
module attributes {stable_mosaic.version = 11 : i64} {
  func.func @attr_encoder_kernel(%arg0: i32, %arg1: memref<8x8xi32, #tpu.memory_space<vmem>>, %arg2: memref<8x8xf32, #tpu.memory_space<vmem>>, %arg3: memref<8x8xf32, #tpu.memory_space<vmem>>, %arg4: memref<8x32xbf16, #tpu.memory_space<vmem>>, %arg5: memref<16x32xbf16, #tpu.memory_space<vmem>>, %arg6: memref<32x32xbf16, #tpu.memory_space<vmem>>, %arg7: memref<32x32xbf16, #tpu.memory_space<vmem>>, %arg8: memref<1x32xf32, #tpu.memory_space<vmem>>, %arg9: memref<1x32xf32, #tpu.memory_space<vmem>>, %arg10: memref<8x32xf32, #tpu.memory_space<vmem>>) attributes {dimension_semantics = [#tpu.dimension_semantics<parallel>], iteration_bounds = array<i64: 1>, scalar_prefetch = 0 : i64, scratch_operands = 0 : i64, tpu.core_type = #tpu.core_type<tc>, window_params = [{transform_indices = @transform_0, window_bounds = array<i64: 8, 8>}, {transform_indices = @transform_1, window_bounds = array<i64: 8, 8>}, {transform_indices = @transform_2, window_bounds = array<i64: 8, 8>}, {transform_indices = @transform_3, window_bounds = array<i64: 8, 32>}, {pipeline_mode = #tpu.pipeline_mode<synchronous>, transform_indices = @transform_4, window_bounds = array<i64: 16, 32>}, {pipeline_mode = #tpu.pipeline_mode<synchronous>, transform_indices = @transform_5, window_bounds = array<i64: 32, 32>}, {pipeline_mode = #tpu.pipeline_mode<synchronous>, transform_indices = @transform_6, window_bounds = array<i64: 32, 32>}, {pipeline_mode = #tpu.pipeline_mode<synchronous>, transform_indices = @transform_7, window_bounds = array<i64: 1, 32>}, {pipeline_mode = #tpu.pipeline_mode<synchronous>, transform_indices = @transform_8, window_bounds = array<i64: 1, 32>}, {transform_indices = @transform_9, window_bounds = array<i64: 8, 32>}]} {
    %c0 = arith.constant 0 : index
    %c0_0 = arith.constant 0 : index
    %0 = vector.load %arg1[%c0, %c0_0] : memref<8x8xi32, #tpu.memory_space<vmem>>, vector<8x8xi32>
    %c0_1 = arith.constant 0 : index
    %c0_2 = arith.constant 0 : index
    %1 = vector.load %arg2[%c0_1, %c0_2] : memref<8x8xf32, #tpu.memory_space<vmem>>, vector<8x8xf32>
    %2 = arith.negf %1 : vector<8x8xf32>
    %3 = math.exp %2 : vector<8x8xf32>
    %cst = arith.constant 1.000000e+00 : f32
    %4 = vector.broadcast %cst : f32 to vector<8x8xf32>
    %5 = arith.addf %4, %3 : vector<8x8xf32>
    %6 = arith.divf %4, %5 : vector<8x8xf32>
    %c0_3 = arith.constant 0 : index
    %c0_4 = arith.constant 0 : index
    %7 = vector.load %arg3[%c0_3, %c0_4] : memref<8x8xf32, #tpu.memory_space<vmem>>, vector<8x8xf32>
    %c0_5 = arith.constant 0 : index
    %c0_6 = arith.constant 0 : index
    %8 = vector.load %arg4[%c0_5, %c0_6] : memref<8x32xbf16, #tpu.memory_space<vmem>>, vector<8x32xbf16>
    %9 = arith.extf %8 : vector<8x32xbf16> to vector<8x32xf32>
    %10 = tpu.iota {dimensions = array<i32: 2>} : vector<8x8x16xi32>
    %11 = vector.shape_cast %0 : vector<8x8xi32> to vector<8x8x1xi32>
    %12 = vector.broadcast %11 : vector<8x8x1xi32> to vector<8x8x16xi32>
    %13 = arith.cmpi eq, %12, %10 : vector<8x8x16xi32>
    %14 = arith.extui %13 : vector<8x8x16xi1> to vector<8x8x16xi32>
    %15 = arith.sitofp %14 : vector<8x8x16xi32> to vector<8x8x16xf32>
    %16 = vector.shape_cast %15 : vector<8x8x16xf32> to vector<64x16xf32>
    %17 = arith.truncf %16 : vector<64x16xf32> to vector<64x16xbf16>
    %c0_7 = arith.constant 0 : index
    %c0_8 = arith.constant 0 : index
    %18 = vector.load %arg5[%c0_7, %c0_8] : memref<16x32xbf16, #tpu.memory_space<vmem>>, vector<16x32xbf16>
    %cst_9 = arith.constant dense<0.000000e+00> : vector<64x32xf32>
    %19 = tpu.matmul %17, %18, %cst_9 {dimension_numbers = #tpu.dot_dimension_numbers<[1], [0], [0], [1], [0, 0, 1, 1], [], []>} : vector<64x16xbf16>, vector<16x32xbf16>, vector<64x32xf32> -> vector<64x32xf32>
    %20 = vector.shape_cast %19 : vector<64x32xf32> to vector<8x8x32xf32>
    %c0_10 = arith.constant 0 : index
    %c0_11 = arith.constant 0 : index
    %21 = vector.load %arg7[%c0_10, %c0_11] : memref<32x32xbf16, #tpu.memory_space<vmem>>, vector<32x32xbf16>
    %cst_12 = arith.constant dense<0.000000e+00> : vector<8x32xf32>
    %22 = tpu.matmul %8, %21, %cst_12 {dimension_numbers = #tpu.dot_dimension_numbers<[1], [0], [0], [1], [0, 0, 1, 1], [], []>} : vector<8x32xbf16>, vector<32x32xbf16>, vector<8x32xf32> -> vector<8x32xf32>
    %c0_13 = arith.constant 0 : index
    %c0_14 = arith.constant 0 : index
    %23 = vector.load %arg8[%c0_13, %c0_14] : memref<1x32xf32, #tpu.memory_space<vmem>>, vector<1x32xf32>
    %24 = vector.broadcast %23 : vector<1x32xf32> to vector<8x32xf32>
    %25 = arith.mulf %9, %24 : vector<8x32xf32>
    %cst_15 = arith.constant dense<0.000000e+00> : vector<8xf32>
    %26 = vector.multi_reduction <add>, %25, %cst_15 [1] : vector<8x32xf32> to vector<8xf32>
    %27 = vector.shape_cast %26 : vector<8xf32> to vector<8x1xf32>
    %c0_16 = arith.constant 0 : index
    %c0_17 = arith.constant 0 : index
    %28 = vector.load %arg9[%c0_16, %c0_17] : memref<1x32xf32, #tpu.memory_space<vmem>>, vector<1x32xf32>
    %29 = vector.broadcast %28 : vector<1x32xf32> to vector<8x32xf32>
    %30 = arith.mulf %9, %29 : vector<8x32xf32>
    %cst_18 = arith.constant dense<0.000000e+00> : vector<8xf32>
    %31 = vector.multi_reduction <add>, %30, %cst_18 [1] : vector<8x32xf32> to vector<8xf32>
    %32 = vector.shape_cast %31 : vector<8xf32> to vector<8x1xf32>
    %33 = vector.shape_cast %22 : vector<8x32xf32> to vector<8x1x32xf32>
    %34 = vector.broadcast %33 : vector<8x1x32xf32> to vector<8x8x32xf32>
    %35 = arith.mulf %20, %34 : vector<8x8x32xf32>
    %cst_19 = arith.constant dense<0.000000e+00> : vector<8x8xf32>
    %36 = vector.multi_reduction <add>, %35, %cst_19 [2] : vector<8x8x32xf32> to vector<8x8xf32>
    %37 = vector.broadcast %27 : vector<8x1xf32> to vector<8x8xf32>
    %38 = arith.mulf %6, %37 : vector<8x8xf32>
    %39 = arith.addf %36, %38 : vector<8x8xf32>
    %40 = vector.broadcast %32 : vector<8x1xf32> to vector<8x8xf32>
    %41 = arith.addf %39, %40 : vector<8x8xf32>
    %42 = arith.mulf %41, %7 : vector<8x8xf32>
    %cst_20 = arith.constant dense<0xFF800000> : vector<8xf32>
    %43 = vector.multi_reduction <maximumf>, %42, %cst_20 [1] : vector<8x8xf32> to vector<8xf32>
    %44 = vector.shape_cast %43 : vector<8xf32> to vector<8x1xf32>
    %45 = vector.broadcast %44 : vector<8x1xf32> to vector<8x8xf32>
    %46 = arith.subf %42, %45 : vector<8x8xf32>
    %47 = math.exp %46 : vector<8x8xf32>
    %cst_21 = arith.constant dense<0.000000e+00> : vector<8xf32>
    %48 = vector.multi_reduction <add>, %47, %cst_21 [1] : vector<8x8xf32> to vector<8xf32>
    %49 = vector.shape_cast %48 : vector<8xf32> to vector<8x1xf32>
    %50 = tpu.reciprocal %49 {approx = true} : vector<8x1xf32> -> vector<8x1xf32>
    %51 = vector.broadcast %50 : vector<8x1xf32> to vector<8x8xf32>
    %52 = arith.mulf %47, %51 : vector<8x8xf32>
    %53 = vector.shape_cast %52 : vector<8x8xf32> to vector<8x8x1xf32>
    %54 = vector.broadcast %53 : vector<8x8x1xf32> to vector<8x8x32xf32>
    %55 = arith.mulf %54, %20 : vector<8x8x32xf32>
    %cst_22 = arith.constant dense<0.000000e+00> : vector<8x32xf32>
    %56 = vector.multi_reduction <add>, %55, %cst_22 [1] : vector<8x8x32xf32> to vector<8x32xf32>
    %57 = arith.mulf %52, %6 : vector<8x8xf32>
    %cst_23 = arith.constant dense<0.000000e+00> : vector<8xf32>
    %58 = vector.multi_reduction <add>, %57, %cst_23 [1] : vector<8x8xf32> to vector<8xf32>
    %59 = vector.shape_cast %58 : vector<8xf32> to vector<8x1xf32>
    %60 = arith.truncf %56 : vector<8x32xf32> to vector<8x32xbf16>
    %c0_24 = arith.constant 0 : index
    %c0_25 = arith.constant 0 : index
    %61 = vector.load %arg6[%c0_24, %c0_25] : memref<32x32xbf16, #tpu.memory_space<vmem>>, vector<32x32xbf16>
    %cst_26 = arith.constant dense<0.000000e+00> : vector<8x32xf32>
    %62 = tpu.matmul %60, %61, %cst_26 {dimension_numbers = #tpu.dot_dimension_numbers<[1], [0], [0], [1], [0, 0, 1, 1], [], []>} : vector<8x32xbf16>, vector<32x32xbf16>, vector<8x32xf32> -> vector<8x32xf32>
    %c0_27 = arith.constant 0 : index
    %c0_28 = arith.constant 0 : index
    %63 = vector.load %arg8[%c0_27, %c0_28] : memref<1x32xf32, #tpu.memory_space<vmem>>, vector<1x32xf32>
    %64 = vector.broadcast %59 : vector<8x1xf32> to vector<8x32xf32>
    %65 = vector.broadcast %63 : vector<1x32xf32> to vector<8x32xf32>
    %66 = arith.mulf %64, %65 : vector<8x32xf32>
    %67 = arith.addf %62, %66 : vector<8x32xf32>
    %c0_29 = arith.constant 0 : index
    %c0_30 = arith.constant 0 : index
    %68 = vector.load %arg9[%c0_29, %c0_30] : memref<1x32xf32, #tpu.memory_space<vmem>>, vector<1x32xf32>
    %69 = vector.broadcast %68 : vector<1x32xf32> to vector<8x32xf32>
    %70 = arith.addf %67, %69 : vector<8x32xf32>
    %c0_31 = arith.constant 0 : index
    %c0_32 = arith.constant 0 : index
    %71 = vector.load %arg10[%c0_31, %c0_32] : memref<8x32xf32, #tpu.memory_space<vmem>>, vector<8x32xf32>
    tpu.vector_store %arg10[%c0_31, %c0_32], %70 {strides = array<i32>} : memref<8x32xf32, #tpu.memory_space<vmem>>, vector<8x32xf32>,
    return
  }
  func.func @transform_0(%arg0: i32) -> (i32, i32) {
    %c0_i32 = arith.constant 0 : i32
    %c0_i32_0 = arith.constant 0 : i32
    return %arg0, %c0_i32 : i32, i32
  }
  func.func @transform_1(%arg0: i32) -> (i32, i32) {
    %c0_i32 = arith.constant 0 : i32
    %c0_i32_0 = arith.constant 0 : i32
    return %arg0, %c0_i32 : i32, i32
  }
  func.func @transform_2(%arg0: i32) -> (i32, i32) {
    %c0_i32 = arith.constant 0 : i32
    %c0_i32_0 = arith.constant 0 : i32
    return %arg0, %c0_i32 : i32, i32
  }
  func.func @transform_3(%arg0: i32) -> (i32, i32) {
    %c0_i32 = arith.constant 0 : i32
    %c0_i32_0 = arith.constant 0 : i32
    return %arg0, %c0_i32 : i32, i32
  }
  func.func @transform_4(%arg0: i32) -> (i32, i32) {
    %c0_i32 = arith.constant 0 : i32
    %c0_i32_0 = arith.constant 0 : i32
    %c0_i32_1 = arith.constant 0 : i32
    return %c0_i32, %c0_i32_0 : i32, i32
  }
  func.func @transform_5(%arg0: i32) -> (i32, i32) {
    %c0_i32 = arith.constant 0 : i32
    %c0_i32_0 = arith.constant 0 : i32
    %c0_i32_1 = arith.constant 0 : i32
    return %c0_i32, %c0_i32_0 : i32, i32
  }
  func.func @transform_6(%arg0: i32) -> (i32, i32) {
    %c0_i32 = arith.constant 0 : i32
    %c0_i32_0 = arith.constant 0 : i32
    %c0_i32_1 = arith.constant 0 : i32
    return %c0_i32, %c0_i32_0 : i32, i32
  }
  func.func @transform_7(%arg0: i32) -> (i32, i32) {
    %c0_i32 = arith.constant 0 : i32
    %c0_i32_0 = arith.constant 0 : i32
    %c0_i32_1 = arith.constant 0 : i32
    return %c0_i32, %c0_i32_0 : i32, i32
  }
  func.func @transform_8(%arg0: i32) -> (i32, i32) {
    %c0_i32 = arith.constant 0 : i32
    %c0_i32_0 = arith.constant 0 : i32
    %c0_i32_1 = arith.constant 0 : i32
    return %c0_i32, %c0_i32_0 : i32, i32
  }
  func.func @transform_9(%arg0: i32) -> (i32, i32) {
    %c0_i32 = arith.constant 0 : i32
    %c0_i32_0 = arith.constant 0 : i32
    return %arg0, %c0_i32 : i32, i32
  }
}

</mosaic_0001>

<llo_original>
// kernel: attr_encoder_forward.1
$region0: #{attr_encoder_forward.1}
  #allocation0 [shape = 'u32[]', space=smem, size = 0x4, offset = 0x4, fixed_abs, tag = 'smem constant byte address 0x4 - core index']
  #allocation1 [shape = 'u32[144,128]{1,0:T(1,128)}', space=vmem, size = 0x12000, scoped, tag = 'internal scratch']
  %s0 = inlined_call_operand.vmem [shape: s32[8,8], index: 0, kind: input, shape index: {}]
  %s1 = inlined_call_operand.vmem [shape: f32[8,8], index: 1, kind: input, shape index: {}]
  %s2 = inlined_call_operand.vmem [shape: f32[8,8], index: 2, kind: input, shape index: {}]
  %s3 = inlined_call_operand.vmem [shape: bf16[8,32], index: 3, kind: input, shape index: {}]
  %s4 = inlined_call_operand.vmem [shape: bf16[16,32], index: 4, kind: input, shape index: {}]
  %s5 = inlined_call_operand.vmem [shape: bf16[32,32], index: 5, kind: input, shape index: {}]
  %s6 = inlined_call_operand.vmem [shape: bf16[32,32], index: 6, kind: input, shape index: {}]
  %s7 = inlined_call_operand.vmem [shape: f32[1,32], index: 7, kind: input, shape index: {}]
  %s8 = inlined_call_operand.vmem [shape: f32[1,32], index: 8, kind: input, shape index: {}]
  %s9 = inlined_call_operand.vmem [shape: f32[8,32], index: 9, kind: output, shape index: {}]
  %s10 = sld [smem:[#allocation0]]
  $region46: #{attr_encoder_forward.1} parent=0
    _
  %s12 = ssub.s32 1, %s10
  %s13 = scalar_select 0, %s12, %s10
  // Predicated region
  $region2: #{attr_encoder_forward.1} parent=0 // pred_check
    _
  $region3: #{attr_encoder_forward.1} parent=0 // pred_check_branch
    %15 = sbr.rel (0) target = $region5
  $region4: #{attr_encoder_forward.1} parent=0 // pred_region
    _
  $region5: #{attr_encoder_forward.1} parent=0 // pred_fallthru
    _
  // Predicated region
  $region6: #{attr_encoder_forward.1} parent=0 // pred_check
    _
  $region7: #{attr_encoder_forward.1} parent=0 // pred_check_branch
    %17 = sbr.rel (0) target = $region9
  $region8: #{attr_encoder_forward.1} parent=0 // pred_region
    _
  $region9: #{attr_encoder_forward.1} parent=0 // pred_fallthru
    _
  // Predicated region
  $region10: #{attr_encoder_forward.1} parent=0 // pred_check
    _
  $region11: #{attr_encoder_forward.1} parent=0 // pred_check_branch
    %19 = sbr.rel (0) target = $region13
  $region12: #{attr_encoder_forward.1} parent=0 // pred_region
    _
  $region13: #{attr_encoder_forward.1} parent=0 // pred_fallthru
    _
  // Predicated region
  $region14: #{attr_encoder_forward.1} parent=0 // pred_check
    _
  $region15: #{attr_encoder_forward.1} parent=0 // pred_check_branch
    %21 = sbr.rel (0) target = $region17
  $region16: #{attr_encoder_forward.1} parent=0 // pred_region
    _
  $region17: #{attr_encoder_forward.1} parent=0 // pred_fallthru
    _
  // Predicated region
  $region18: #{attr_encoder_forward.1} parent=0 // pred_check
    _
  $region19: #{attr_encoder_forward.1} parent=0 // pred_check_branch
    %23 = sbr.rel (0) target = $region21
  $region20: #{attr_encoder_forward.1} parent=0 // pred_region
    _
  $region21: #{attr_encoder_forward.1} parent=0 // pred_fallthru
    _
  // Predicated region
  $region22: #{attr_encoder_forward.1} parent=0 // pred_check
    _
  $region23: #{attr_encoder_forward.1} parent=0 // pred_check_branch
    %25 = sbr.rel (0) target = $region25
  $region24: #{attr_encoder_forward.1} parent=0 // pred_region
    _
  $region25: #{attr_encoder_forward.1} parent=0 // pred_fallthru
    _
  // Predicated region
  $region26: #{attr_encoder_forward.1} parent=0 // pred_check
    _
  $region27: #{attr_encoder_forward.1} parent=0 // pred_check_branch
    %27 = sbr.rel (0) target = $region29
  $region28: #{attr_encoder_forward.1} parent=0 // pred_region
    _
  $region29: #{attr_encoder_forward.1} parent=0 // pred_fallthru
    _
  // Predicated region
  $region30: #{attr_encoder_forward.1} parent=0 // pred_check
    _
  $region31: #{attr_encoder_forward.1} parent=0 // pred_check_branch
    %29 = sbr.rel (0) target = $region33
  $region32: #{attr_encoder_forward.1} parent=0 // pred_region
    _
  $region33: #{attr_encoder_forward.1} parent=0 // pred_fallthru
    _
  // Predicated region
  $region34: #{attr_encoder_forward.1} parent=0 // pred_check
    _
  $region35: #{attr_encoder_forward.1} parent=0 // pred_check_branch
    %31 = sbr.rel (0) target = $region37
  $region36: #{attr_encoder_forward.1} parent=0 // pred_region
    _
  $region37: #{attr_encoder_forward.1} parent=0 // pred_fallthru
    _
  %v33 = vld [vmem:[%s0] sm:$0xff]
  %v34 = vld [vmem:[%s1] sm:$0xff]
  %v35 = vxor.u32 %v34, 2147483648
  %v36 = vmul.f32 %v35, 1.442695
  %v37 = vpow.pop %v36
  %v38 = vadd.f32 %v37, 1.0
  %v39 = vrcp.pop %v38
  %v40 = vmul.f32 1.0, %v39
  %v41 = vld [vmem:[%s2] sm:$0xff]
  %v42 = vld [vmem:[%s3] sm:$0xf]
  %v43 = vunpack.c.l.bf16 %v42
  %v44 = vlaneseq
  %v45 = vand.u32 %v44, 127
  %v46 = vlaneseq
  %v47 = vshrl.u32 %v46, 7
  %v48 = vsub.s32 0, %v47
  %v49 = vrot.slane %v33, %v48
  %51 = vbcast.lane.b32.xlu0 %v49, 256
  %v52 = vpop.permute.xlu0 %51
  %v53 = vlaneseq
  %v54 = vshrl.u32 %v53, 7
  %v55 = vsub.s32 1, %v54
  %v56 = vrot.slane %v33, %v55
  %58 = vbcast.lane.b32.xlu0 %v56, 256
  %v59 = vpop.permute.xlu0 %58
  %v60 = vlaneseq
  %v61 = vshrl.u32 %v60, 7
  %v62 = vsub.s32 2, %v61
  %v63 = vrot.slane %v33, %v62
  %65 = vbcast.lane.b32.xlu0 %v63, 256
  %v66 = vpop.permute.xlu0 %65
  %v67 = vlaneseq
  %v68 = vshrl.u32 %v67, 7
  %v69 = vsub.s32 3, %v68
  %v70 = vrot.slane %v33, %v69
  %72 = vbcast.lane.b32.xlu0 %v70, 256
  %v73 = vpop.permute.xlu0 %72
  %v74 = vlaneseq
  %v75 = vshrl.u32 %v74, 7
  %v76 = vsub.s32 4, %v75
  %v77 = vrot.slane %v33, %v76
  %79 = vbcast.lane.b32.xlu0 %v77, 256
  %v80 = vpop.permute.xlu0 %79
  %v81 = vlaneseq
  %v82 = vshrl.u32 %v81, 7
  %v83 = vsub.s32 5, %v82
  %v84 = vrot.slane %v33, %v83
  %86 = vbcast.lane.b32.xlu0 %v84, 256
  %v87 = vpop.permute.xlu0 %86
  %v88 = vlaneseq
  %v89 = vshrl.u32 %v88, 7
  %v90 = vsub.s32 6, %v89
  %v91 = vrot.slane %v33, %v90
  %93 = vbcast.lane.b32.xlu0 %v91, 256
  %v94 = vpop.permute.xlu0 %93
  %v95 = vlaneseq
  %v96 = vshrl.u32 %v95, 7
  %v97 = vsub.s32 7, %v96
  %v98 = vrot.slane %v33, %v97
  %100 = vbcast.lane.b32.xlu0 %v98, 256
  %v101 = vpop.permute.xlu0 %100
  %vm102 = vcmp.eq.s32.totalorder %v52, %v45
  %vm103 = vcmp.eq.s32.totalorder %v59, %v45
  %vm104 = vcmp.eq.s32.totalorder %v66, %v45
  %vm105 = vcmp.eq.s32.totalorder %v73, %v45
  %vm106 = vcmp.eq.s32.totalorder %v80, %v45
  %vm107 = vcmp.eq.s32.totalorder %v87, %v45
  %vm108 = vcmp.eq.s32.totalorder %v94, %v45
  %vm109 = vcmp.eq.s32.totalorder %v101, %v45
  %v110 = vsel %vm102, 1, 0
  %v111 = vsel %vm103, 1, 0
  %v112 = vsel %vm104, 1, 0
  %v113 = vsel %vm105, 1, 0
  %v114 = vsel %vm106, 1, 0
  %v115 = vsel %vm107, 1, 0
  %v116 = vsel %vm108, 1, 0
  %v117 = vsel %vm109, 1, 0
  %v118 = vcvt.s32.f32 %v110
  %v119 = vcvt.s32.f32 %v111
  %v120 = vcvt.s32.f32 %v112
  %v121 = vcvt.s32.f32 %v113
  %v122 = vcvt.s32.f32 %v114
  %v123 = vcvt.s32.f32 %v115
  %v124 = vcvt.s32.f32 %v116
  %v125 = vcvt.s32.f32 %v117
  %v126 = vpack.c.bf16 %v119, %v118
  %v127 = vpack.c.bf16 %v121, %v120
  %v128 = vpack.c.bf16 %v123, %v122
  %v129 = vpack.c.bf16 %v125, %v124
  %v130 = vld [vmem:[%s4] sm:$0xf]
  %v131 = vld [vmem:[%s4 + $0x4] sm:$0xf]
  %v134 = vunpack.c.l.b16 %v130
  %v135 = vunpack.c.l.b16 %v131
  %v136 = vpack.c.b16 %v135, %v134
  %vm138 = vcmask 130048
  %v140 = vsel %vm138, %v126, 0
  %v143 = vsel %vm138, %v127, 0
  %v146 = vsel %vm138, %v128, 0
  %v149 = vsel %vm138, %v129, 0
  %151 = vmatprep.subr.bf16.mxu0 0
  %152 = vmatpush1.bf16.msra.mxu0 %v136
  %153 = vmatprep.subr.bf16.mxu0 0
  %154 = vmatpush1.bf16.msra.mxu0 0
  %155 = vmatprep.subr.bf16.mxu0 0
  %156 = vmatpush1.bf16.msra.mxu0 0
  %157 = vmatprep.subr.bf16.mxu0 0
  %158 = vmatpush1.bf16.msra.mxu0 0
  %159 = vmatprep.subr.bf16.mxu0 0
  %160 = vmatpush1.bf16.msra.mxu0 0
  %161 = vmatprep.subr.bf16.mxu0 0
  %162 = vmatpush1.bf16.msra.mxu0 0
  %163 = vmatprep.subr.bf16.mxu0 0
  %164 = vmatpush1.bf16.msra.mxu0 0
  %165 = vmatprep.subr.bf16.mxu0 0
  %166 = vmatpush1.bf16.msra.mxu0 0
  %167 = vmatprep.subr.bf16.mxu0 0
  %168 = vmatpush1.bf16.msra.mxu0 0
  %169 = vmatprep.subr.bf16.mxu0 0
  %170 = vmatpush1.bf16.msra.mxu0 0
  %171 = vmatprep.subr.bf16.mxu0 0
  %172 = vmatpush1.bf16.msra.mxu0 0
  %173 = vmatprep.subr.bf16.mxu0 0
  %174 = vmatpush1.bf16.msra.mxu0 0
  %175 = vmatprep.subr.bf16.mxu0 0
  %176 = vmatpush1.bf16.msra.mxu0 0
  %177 = vmatprep.subr.bf16.mxu0 0
  %178 = vmatpush1.bf16.msra.mxu0 0
  %179 = vmatprep.subr.bf16.mxu0 0
  %180 = vmatpush1.bf16.msra.mxu0 0
  %181 = vmatprep.subr.bf16.mxu0 0
  %182 = vmatpush1.bf16.msra.mxu0 0
  %183 = vmatprep.mubr.bf16.mxu0 0
  %184 = vmatmul.mubr.bf16.gmra.mrb[0].mxu0 %v140
  %v185 = vpop.f32.mrb[0].mxu0
  %v186 = vadd.f32 0.0, %v185
  %v187 = vpop.f32.mrb[0].mxu0
  %v188 = vpop.f32.mrb[0].mxu0
  %v189 = vadd.f32 0.0, %v188
  %v190 = vpop.f32.mrb[0].mxu0
  %191 = vmatprep.mubr.bf16.mxu0 0
  %192 = vmatmul.mubr.bf16.gmra.mrb[0].mxu0 %v143
  %v193 = vpop.f32.mrb[0].mxu0
  %v194 = vadd.f32 0.0, %v193
  %v195 = vpop.f32.mrb[0].mxu0
  %v196 = vpop.f32.mrb[0].mxu0
  %v197 = vadd.f32 0.0, %v196
  %v198 = vpop.f32.mrb[0].mxu0
  %199 = vmatprep.mubr.bf16.mxu0 0
  %200 = vmatmul.mubr.bf16.gmra.mrb[0].mxu0 %v146
  %v201 = vpop.f32.mrb[0].mxu0
  %v202 = vadd.f32 0.0, %v201
  %v203 = vpop.f32.mrb[0].mxu0
  %v204 = vpop.f32.mrb[0].mxu0
  %v205 = vadd.f32 0.0, %v204
  %v206 = vpop.f32.mrb[0].mxu0
  %207 = vmatprep.mubr.bf16.mxu0 0
  %208 = vmatmul.mubr.bf16.gmra.mrb[0].mxu0 %v149
  %v209 = vpop.f32.mrb[0].mxu0
  %v210 = vadd.f32 0.0, %v209
  %v211 = vpop.f32.mrb[0].mxu0
  %v212 = vpop.f32.mrb[0].mxu0
  %v213 = vadd.f32 0.0, %v212
  %v214 = vpop.f32.mrb[0].mxu0
  %215 = vdwg.mxu0
  %v216 = vld [vmem:[%s6] sm:$0xf]
  %v217 = vld [vmem:[%s6 + $0x4] sm:$0xf]
  %v218 = vld [vmem:[%s6 + $0x8] sm:$0xf]
  %v219 = vld [vmem:[%s6 + $0xc] sm:$0xf]
  %v224 = vunpack.c.l.b16 %v216
  %v225 = vunpack.c.l.b16 %v217
  %v226 = vunpack.c.l.b16 %v218
  %v227 = vunpack.c.l.b16 %v219
  %v228 = vpack.c.b16 %v225, %v224
  %v229 = vpack.c.b16 %v227, %v226
  %vm232 = vcmask 261120
  %v234 = vsel %vm232, %v42, 0
  %236 = vmatprep.subr.bf16.mxu0 0
  %237 = vmatpush1.bf16.msra.mxu0 %v228
  %238 = vmatprep.subr.bf16.mxu0 0
  %239 = vmatpush1.bf16.msra.mxu0 %v229
  %240 = vmatprep.subr.bf16.mxu0 0
  %241 = vmatpush1.bf16.msra.mxu0 0
  %242 = vmatprep.subr.bf16.mxu0 0
  %243 = vmatpush1.bf16.msra.mxu0 0
  %244 = vmatprep.subr.bf16.mxu0 0
  %245 = vmatpush1.bf16.msra.mxu0 0
  %246 = vmatprep.subr.bf16.mxu0 0
  %247 = vmatpush1.bf16.msra.mxu0 0
  %248 = vmatprep.subr.bf16.mxu0 0
  %249 = vmatpush1.bf16.msra.mxu0 0
  %250 = vmatprep.subr.bf16.mxu0 0
  %251 = vmatpush1.bf16.msra.mxu0 0
  %252 = vmatprep.subr.bf16.mxu0 0
  %253 = vmatpush1.bf16.msra.mxu0 0
  %254 = vmatprep.subr.bf16.mxu0 0
  %255 = vmatpush1.bf16.msra.mxu0 0
  %256 = vmatprep.subr.bf16.mxu0 0
  %257 = vmatpush1.bf16.msra.mxu0 0
  %258 = vmatprep.subr.bf16.mxu0 0
  %259 = vmatpush1.bf16.msra.mxu0 0
  %260 = vmatprep.subr.bf16.mxu0 0
  %261 = vmatpush1.bf16.msra.mxu0 0
  %262 = vmatprep.subr.bf16.mxu0 0
  %263 = vmatpush1.bf16.msra.mxu0 0
  %264 = vmatprep.subr.bf16.mxu0 0
  %265 = vmatpush1.bf16.msra.mxu0 0
  %266 = vmatprep.subr.bf16.mxu0 0
  %267 = vmatpush1.bf16.msra.mxu0 0
  %268 = vmatprep.mubr.bf16.mxu0 0
  %269 = vmatmul.mubr.bf16.gmra.mrb[0].mxu0 %v234
  %v270 = vpop.f32.mrb[0].mxu0
  %v271 = vadd.f32 0.0, %v270
  %v272 = vpop.f32.mrb[0].mxu0
  %v273 = vpop.f32.mrb[0].mxu0
  %v274 = vpop.f32.mrb[0].mxu0
  %275 = vdwg.mxu0
  %v276 = vld [vmem:[%s7] sm:$0x1]
  %v278 = vlaneseq
  %v279 = vshrl.u32 %v278, 7
  %v280 = vsub.s32 0, %v279
  %v281 = vrot.slane %v276, %v280
  %v283 = vmul.f32 %v43, %v281
  %v284 = vsel %vm232, %v283, 0.0
  %285 = vadd.xlane.f32.xlu0 %v284
  %v286 = vpop.xlane.xlu0 %285
  %v287 = vld [vmem:[%s8] sm:$0x1]
  %v289 = vlaneseq
  %v290 = vshrl.u32 %v289, 7
  %v291 = vsub.s32 0, %v290
  %v292 = vrot.slane %v287, %v291
  %v294 = vmul.f32 %v43, %v292
  %v295 = vsel %vm232, %v294, 0.0
  %296 = vadd.xlane.f32.xlu0 %v295
  %v297 = vpop.xlane.xlu0 %296
  %v299 = vcombine.high %v271, %v271
  %v301 = vunpack.c.l.s4 1966171168
  %v302 = vunpack.c.0.s8 %v301
  %v303 = vlaneseq
  %v304 = vshrl.u32 %v303, 7
  %v305 = vsub.s32 %v302, %v304
  %v306 = vrot.slane %v271, %v305
  %v308 = vunpack.c.l.s4 1966171168
  %v309 = vunpack.c.0.s8 %v308
  %v310 = vlaneseq
  %v311 = vshrl.u32 %v310, 7
  %v312 = vsub.s32 %v309, %v311
  %v313 = vrot.slane %v299, %v312
  %v314 = vcombine.high %v306, %v306
  %v315 = vcombine.high %v313, %v313
  %v317 = vunpack.c.l.s4 1966171168
  %v318 = vunpack.c.0.s8 %v317
  %v319 = vlaneseq
  %v320 = vshrl.u32 %v319, 7
  %v321 = vsub.s32 %v318, %v320
  %v322 = vrot.slane %v306, %v321
  %v324 = vunpack.c.l.s4 1966171168
  %v325 = vunpack.c.0.s8 %v324
  %v326 = vlaneseq
  %v327 = vshrl.u32 %v326, 7
  %v328 = vsub.s32 %v325, %v327
  %v329 = vrot.slane %v313, %v328
  %v331 = vunpack.c.l.s4 1966171168
  %v332 = vunpack.c.0.s8 %v331
  %v333 = vlaneseq
  %v334 = vshrl.u32 %v333, 7
  %v335 = vsub.s32 %v332, %v334
  %v336 = vrot.slane %v314, %v335
  %v338 = vunpack.c.l.s4 1966171168
  %v339 = vunpack.c.0.s8 %v338
  %v340 = vlaneseq
  %v341 = vshrl.u32 %v340, 7
  %v342 = vsub.s32 %v339, %v341
  %v343 = vrot.slane %v315, %v342
  %v344 = vcombine.high %v322, %v322
  %v345 = vcombine.high %v329, %v329
  %v346 = vcombine.high %v336, %v336
  %v347 = vcombine.high %v343, %v343
  %v348 = vlaneseq
  %v349 = vshrl.u32 %v348, 7
  %v350 = vsub.s32 0, %v349
  %v351 = vrot.slane %v322, %v350
  %v352 = vlaneseq
  %v353 = vshrl.u32 %v352, 7
  %v354 = vsub.s32 0, %v353
  %v355 = vrot.slane %v336, %v354
  %v356 = vlaneseq
  %v357 = vshrl.u32 %v356, 7
  %v358 = vsub.s32 0, %v357
  %v359 = vrot.slane %v344, %v358
  %v360 = vlaneseq
  %v361 = vshrl.u32 %v360, 7
  %v362 = vsub.s32 0, %v361
  %v363 = vrot.slane %v346, %v362
  %v364 = vlaneseq
  %v365 = vshrl.u32 %v364, 7
  %v366 = vsub.s32 0, %v365
  %v367 = vrot.slane %v329, %v366
  %v368 = vlaneseq
  %v369 = vshrl.u32 %v368, 7
  %v370 = vsub.s32 0, %v369
  %v371 = vrot.slane %v343, %v370
  %v372 = vlaneseq
  %v373 = vshrl.u32 %v372, 7
  %v374 = vsub.s32 0, %v373
  %v375 = vrot.slane %v345, %v374
  %v376 = vlaneseq
  %v377 = vshrl.u32 %v376, 7
  %v378 = vsub.s32 0, %v377
  %v379 = vrot.slane %v347, %v378
  %v388 = vmul.f32 %v186, %v351
  %v389 = vmul.f32 %v189, %v355
  %v390 = vmul.f32 %v194, %v359
  %v391 = vmul.f32 %v197, %v363
  %v392 = vmul.f32 %v202, %v367
  %v393 = vmul.f32 %v205, %v371
  %v394 = vmul.f32 %v210, %v375
  %v395 = vmul.f32 %v213, %v379
  %v396 = vsel %vm232, %v388, 0.0
  %397 = vadd.xlane.f32.xlu0 %v396
  %v398 = vpop.xlane.xlu0 %397
  %v399 = vsel %vm232, %v389, 0.0
  %400 = vadd.xlane.f32.xlu0 %v399
  %v401 = vpop.xlane.xlu0 %400
  %v402 = vsel %vm232, %v390, 0.0
  %403 = vadd.xlane.f32.xlu0 %v402
  %v404 = vpop.xlane.xlu0 %403
  %v405 = vsel %vm232, %v391, 0.0
  %406 = vadd.xlane.f32.xlu0 %v405
  %v407 = vpop.xlane.xlu0 %406
  %v408 = vsel %vm232, %v392, 0.0
  %409 = vadd.xlane.f32.xlu0 %v408
  %v410 = vpop.xlane.xlu0 %409
  %v411 = vsel %vm232, %v393, 0.0
  %412 = vadd.xlane.f32.xlu0 %v411
  %v413 = vpop.xlane.xlu0 %412
  %v414 = vsel %vm232, %v394, 0.0
  %415 = vadd.xlane.f32.xlu0 %v414
  %v416 = vpop.xlane.xlu0 %415
  %v417 = vsel %vm232, %v395, 0.0
  %418 = vadd.xlane.f32.xlu0 %v417
  %v419 = vpop.xlane.xlu0 %418
  %v420 = vmul.f32 %v40, %v286
  %v422 = vlaneseq
  %v423 = vshrl.u32 %v422, 7
  %v424 = vsub.s32 0, %v423
  %v425 = vrot.slane %v420, %v424
  %427 = vbcast.lane.b32.xlu0 %v425, 256
  %v428 = vpop.permute.xlu0 %427
  %v429 = vlaneseq
  %v430 = vshrl.u32 %v429, 7
  %v431 = vsub.s32 1, %v430
  %v432 = vrot.slane %v420, %v431
  %434 = vbcast.lane.b32.xlu0 %v432, 256
  %v435 = vpop.permute.xlu0 %434
  %v436 = vlaneseq
  %v437 = vshrl.u32 %v436, 7
  %v438 = vsub.s32 2, %v437
  %v439 = vrot.slane %v420, %v438
  %441 = vbcast.lane.b32.xlu0 %v439, 256
  %v442 = vpop.permute.xlu0 %441
  %v443 = vlaneseq
  %v444 = vshrl.u32 %v443, 7
  %v445 = vsub.s32 3, %v444
  %v446 = vrot.slane %v420, %v445
  %448 = vbcast.lane.b32.xlu0 %v446, 256
  %v449 = vpop.permute.xlu0 %448
  %v450 = vlaneseq
  %v451 = vshrl.u32 %v450, 7
  %v452 = vsub.s32 4, %v451
  %v453 = vrot.slane %v420, %v452
  %455 = vbcast.lane.b32.xlu0 %v453, 256
  %v456 = vpop.permute.xlu0 %455
  %v457 = vlaneseq
  %v458 = vshrl.u32 %v457, 7
  %v459 = vsub.s32 5, %v458
  %v460 = vrot.slane %v420, %v459
  %462 = vbcast.lane.b32.xlu0 %v460, 256
  %v463 = vpop.permute.xlu0 %462
  %v464 = vlaneseq
  %v465 = vshrl.u32 %v464, 7
  %v466 = vsub.s32 6, %v465
  %v467 = vrot.slane %v420, %v466
  %469 = vbcast.lane.b32.xlu0 %v467, 256
  %v470 = vpop.permute.xlu0 %469
  %v471 = vlaneseq
  %v472 = vshrl.u32 %v471, 7
  %v473 = vsub.s32 7, %v472
  %v474 = vrot.slane %v420, %v473
  %476 = vbcast.lane.b32.xlu0 %v474, 256
  %v477 = vpop.permute.xlu0 %476
  %v486 = vadd.f32 %v398, %v428
  %v487 = vadd.f32 %v401, %v435
  %v488 = vadd.f32 %v404, %v442
  %v489 = vadd.f32 %v407, %v449
  %v490 = vadd.f32 %v410, %v456
  %v491 = vadd.f32 %v413, %v463
  %v492 = vadd.f32 %v416, %v470
  %v493 = vadd.f32 %v419, %v477
  %v495 = vlaneseq
  %v496 = vshrl.u32 %v495, 7
  %v497 = vsub.s32 0, %v496
  %v498 = vrot.slane %v297, %v497
  %v499 = vlaneseq
  %v500 = vshrl.u32 %v499, 7
  %v501 = vsub.s32 1, %v500
  %v502 = vrot.slane %v297, %v501
  %v503 = vlaneseq
  %v504 = vshrl.u32 %v503, 7
  %v505 = vsub.s32 2, %v504
  %v506 = vrot.slane %v297, %v505
  %v507 = vlaneseq
  %v508 = vshrl.u32 %v507, 7
  %v509 = vsub.s32 3, %v508
  %v510 = vrot.slane %v297, %v509
  %v511 = vlaneseq
  %v512 = vshrl.u32 %v511, 7
  %v513 = vsub.s32 4, %v512
  %v514 = vrot.slane %v297, %v513
  %v515 = vlaneseq
  %v516 = vshrl.u32 %v515, 7
  %v517 = vsub.s32 5, %v516
  %v518 = vrot.slane %v297, %v517
  %v519 = vlaneseq
  %v520 = vshrl.u32 %v519, 7
  %v521 = vsub.s32 6, %v520
  %v522 = vrot.slane %v297, %v521
  %v523 = vlaneseq
  %v524 = vshrl.u32 %v523, 7
  %v525 = vsub.s32 7, %v524
  %v526 = vrot.slane %v297, %v525
  %v535 = vadd.f32 %v486, %v498
  %v536 = vadd.f32 %v487, %v502
  %v537 = vadd.f32 %v488, %v506
  %v538 = vadd.f32 %v489, %v510
  %v539 = vadd.f32 %v490, %v514
  %v540 = vadd.f32 %v491, %v518
  %v541 = vadd.f32 %v492, %v522
  %v542 = vadd.f32 %v493, %v526
  %v544 = vlaneseq
  %v545 = vshrl.u32 %v544, 7
  %v546 = vsub.s32 0, %v545
  %v547 = vrot.slane %v41, %v546
  %549 = vbcast.lane.b32.xlu0 %v547, 256
  %v550 = vpop.permute.xlu0 %549
  %v551 = vlaneseq
  %v552 = vshrl.u32 %v551, 7
  %v553 = vsub.s32 1, %v552
  %v554 = vrot.slane %v41, %v553
  %556 = vbcast.lane.b32.xlu0 %v554, 256
  %v557 = vpop.permute.xlu0 %556
  %v558 = vlaneseq
  %v559 = vshrl.u32 %v558, 7
  %v560 = vsub.s32 2, %v559
  %v561 = vrot.slane %v41, %v560
  %563 = vbcast.lane.b32.xlu0 %v561, 256
  %v564 = vpop.permute.xlu0 %563
  %v565 = vlaneseq
  %v566 = vshrl.u32 %v565, 7
  %v567 = vsub.s32 3, %v566
  %v568 = vrot.slane %v41, %v567
  %570 = vbcast.lane.b32.xlu0 %v568, 256
  %v571 = vpop.permute.xlu0 %570
  %v572 = vlaneseq
  %v573 = vshrl.u32 %v572, 7
  %v574 = vsub.s32 4, %v573
  %v575 = vrot.slane %v41, %v574
  %577 = vbcast.lane.b32.xlu0 %v575, 256
  %v578 = vpop.permute.xlu0 %577
  %v579 = vlaneseq
  %v580 = vshrl.u32 %v579, 7
  %v581 = vsub.s32 5, %v580
  %v582 = vrot.slane %v41, %v581
  %584 = vbcast.lane.b32.xlu0 %v582, 256
  %v585 = vpop.permute.xlu0 %584
  %v586 = vlaneseq
  %v587 = vshrl.u32 %v586, 7
  %v588 = vsub.s32 6, %v587
  %v589 = vrot.slane %v41, %v588
  %591 = vbcast.lane.b32.xlu0 %v589, 256
  %v592 = vpop.permute.xlu0 %591
  %v593 = vlaneseq
  %v594 = vshrl.u32 %v593, 7
  %v595 = vsub.s32 7, %v594
  %v596 = vrot.slane %v41, %v595
  %598 = vbcast.lane.b32.xlu0 %v596, 256
  %v599 = vpop.permute.xlu0 %598
  %v608 = vmul.f32 %v535, %v550
  %v609 = vmul.f32 %v536, %v557
  %v610 = vmul.f32 %v537, %v564
  %v611 = vmul.f32 %v538, %v571
  %v612 = vmul.f32 %v539, %v578
  %v613 = vmul.f32 %v540, %v585
  %v614 = vmul.f32 %v541, %v592
  %v615 = vmul.f32 %v542, %v599
  %624 = vset.pattern.permute.xlu0 0
  %625 = vperm.xlu0 %624, %v608
  %v626 = vpop.permute.xlu0 %625
  %627 = vset.pattern.permute.xlu0 0
  %628 = vperm.xlu0 %627, %v609
  %v629 = vpop.permute.xlu0 %628
  %630 = vset.pattern.permute.xlu0 0
  %631 = vperm.xlu0 %630, %v610
  %v632 = vpop.permute.xlu0 %631
  %633 = vset.pattern.permute.xlu0 0
  %634 = vperm.xlu0 %633, %v611
  %v635 = vpop.permute.xlu0 %634
  %636 = vset.pattern.permute.xlu0 0
  %637 = vperm.xlu0 %636, %v612
  %v638 = vpop.permute.xlu0 %637
  %639 = vset.pattern.permute.xlu0 0
  %640 = vperm.xlu0 %639, %v613
  %v641 = vpop.permute.xlu0 %640
  %642 = vset.pattern.permute.xlu0 0
  %643 = vperm.xlu0 %642, %v614
  %v644 = vpop.permute.xlu0 %643
  %645 = vset.pattern.permute.xlu0 0
  %646 = vperm.xlu0 %645, %v615
  %v647 = vpop.permute.xlu0 %646
  %v648 = vlaneseq
  %v649 = vshrl.u32 %v648, 7
  %v650 = vsub.s32 %v45, %v649
  %v651 = vrot.slane %v626, %v650
  %v652 = vlaneseq
  %v653 = vshrl.u32 %v652, 7
  %v654 = vsub.s32 %v45, %v653
  %v655 = vrot.slane %v629, %v654
  %v656 = vlaneseq
  %v657 = vshrl.u32 %v656, 7
  %v658 = vsub.s32 %v45, %v657
  %v659 = vrot.slane %v632, %v658
  %v660 = vlaneseq
  %v661 = vshrl.u32 %v660, 7
  %v662 = vsub.s32 %v45, %v661
  %v663 = vrot.slane %v635, %v662
  %v664 = vlaneseq
  %v665 = vshrl.u32 %v664, 7
  %v666 = vsub.s32 %v45, %v665
  %v667 = vrot.slane %v638, %v666
  %v668 = vlaneseq
  %v669 = vshrl.u32 %v668, 7
  %v670 = vsub.s32 %v45, %v669
  %v671 = vrot.slane %v641, %v670
  %v672 = vlaneseq
  %v673 = vshrl.u32 %v672, 7
  %v674 = vsub.s32 %v45, %v673
  %v675 = vrot.slane %v644, %v674
  %v676 = vlaneseq
  %v677 = vshrl.u32 %v676, 7
  %v678 = vsub.s32 %v45, %v677
  %v679 = vrot.slane %v647, %v678
  %vm680 = vcmask 1041409
  %v681 = vsel %vm680, %v655, %v651
  %vm682 = vcmask 1042434
  %v683 = vsel %vm682, %v659, %v681
  %vm684 = vcmask 1043459
  %v685 = vsel %vm684, %v663, %v683
  %vm686 = vcmask 1044484
  %v687 = vsel %vm686, %v667, %v685
  %vm688 = vcmask 1045509
  %v689 = vsel %vm688, %v671, %v687
  %vm690 = vcmask 1046534
  %v691 = vsel %vm690, %v675, %v689
  %vm692 = vcmask 1047559
  %v693 = vsel %vm692, %v679, %v691
  %vm695 = vcmask 64512
  %v696 = vsel %vm695, %v693, -inf
  %697 = vmax.xlane.f32.xlu0 %v696
  %v698 = vpop.xlane.xlu0 %697
  %v700 = vlaneseq
  %v701 = vshrl.u32 %v700, 7
  %v702 = vsub.s32 0, %v701
  %v703 = vrot.slane %v698, %v702
  %v704 = vlaneseq
  %v705 = vshrl.u32 %v704, 7
  %v706 = vsub.s32 1, %v705
  %v707 = vrot.slane %v698, %v706
  %v708 = vlaneseq
  %v709 = vshrl.u32 %v708, 7
  %v710 = vsub.s32 2, %v709
  %v711 = vrot.slane %v698, %v710
  %v712 = vlaneseq
  %v713 = vshrl.u32 %v712, 7
  %v714 = vsub.s32 3, %v713
  %v715 = vrot.slane %v698, %v714
  %v716 = vlaneseq
  %v717 = vshrl.u32 %v716, 7
  %v718 = vsub.s32 4, %v717
  %v719 = vrot.slane %v698, %v718
  %v720 = vlaneseq
  %v721 = vshrl.u32 %v720, 7
  %v722 = vsub.s32 5, %v721
  %v723 = vrot.slane %v698, %v722
  %v724 = vlaneseq
  %v725 = vshrl.u32 %v724, 7
  %v726 = vsub.s32 6, %v725
  %v727 = vrot.slane %v698, %v726
  %v728 = vlaneseq
  %v729 = vshrl.u32 %v728, 7
  %v730 = vsub.s32 7, %v729
  %v731 = vrot.slane %v698, %v730
  %v740 = vsub.f32 %v608, %v703
  %v741 = vsub.f32 %v609, %v707
  %v742 = vsub.f32 %v610, %v711
  %v743 = vsub.f32 %v611, %v715
  %v744 = vsub.f32 %v612, %v719
  %v745 = vsub.f32 %v613, %v723
  %v746 = vsub.f32 %v614, %v727
  %v747 = vsub.f32 %v615, %v731
  %v748 = vmul.f32 %v740, 1.442695
  %v749 = vpow.pop %v748
  %v750 = vmul.f32 %v741, 1.442695
  %v751 = vpow.pop %v750
  %v752 = vmul.f32 %v742, 1.442695
  %v753 = vpow.pop %v752
  %v754 = vmul.f32 %v743, 1.442695
  %v755 = vpow.pop %v754
  %v756 = vmul.f32 %v744, 1.442695
  %v757 = vpow.pop %v756
  %v758 = vmul.f32 %v745, 1.442695
  %v759 = vpow.pop %v758
  %v760 = vmul.f32 %v746, 1.442695
  %v761 = vpow.pop %v760
  %v762 = vmul.f32 %v747, 1.442695
  %v763 = vpow.pop %v762
  %772 = vset.pattern.permute.xlu0 0
  %773 = vperm.xlu0 %772, %v749
  %v774 = vpop.permute.xlu0 %773
  %775 = vset.pattern.permute.xlu0 0
  %776 = vperm.xlu0 %775, %v751
  %v777 = vpop.permute.xlu0 %776
  %778 = vset.pattern.permute.xlu0 0
  %779 = vperm.xlu0 %778, %v753
  %v780 = vpop.permute.xlu0 %779
  %781 = vset.pattern.permute.xlu0 0
  %782 = vperm.xlu0 %781, %v755
  %v783 = vpop.permute.xlu0 %782
  %784 = vset.pattern.permute.xlu0 0
  %785 = vperm.xlu0 %784, %v757
  %v786 = vpop.permute.xlu0 %785
  %787 = vset.pattern.permute.xlu0 0
  %788 = vperm.xlu0 %787, %v759
  %v789 = vpop.permute.xlu0 %788
  %790 = vset.pattern.permute.xlu0 0
  %791 = vperm.xlu0 %790, %v761
  %v792 = vpop.permute.xlu0 %791
  %793 = vset.pattern.permute.xlu0 0
  %794 = vperm.xlu0 %793, %v763
  %v795 = vpop.permute.xlu0 %794
  %v796 = vlaneseq
  %v797 = vshrl.u32 %v796, 7
  %v798 = vsub.s32 %v45, %v797
  %v799 = vrot.slane %v774, %v798
  %v800 = vlaneseq
  %v801 = vshrl.u32 %v800, 7
  %v802 = vsub.s32 %v45, %v801
  %v803 = vrot.slane %v777, %v802
  %v804 = vlaneseq
  %v805 = vshrl.u32 %v804, 7
  %v806 = vsub.s32 %v45, %v805
  %v807 = vrot.slane %v780, %v806
  %v808 = vlaneseq
  %v809 = vshrl.u32 %v808, 7
  %v810 = vsub.s32 %v45, %v809
  %v811 = vrot.slane %v783, %v810
  %v812 = vlaneseq
  %v813 = vshrl.u32 %v812, 7
  %v814 = vsub.s32 %v45, %v813
  %v815 = vrot.slane %v786, %v814
  %v816 = vlaneseq
  %v817 = vshrl.u32 %v816, 7
  %v818 = vsub.s32 %v45, %v817
  %v819 = vrot.slane %v789, %v818
  %v820 = vlaneseq
  %v821 = vshrl.u32 %v820, 7
  %v822 = vsub.s32 %v45, %v821
  %v823 = vrot.slane %v792, %v822
  %v824 = vlaneseq
  %v825 = vshrl.u32 %v824, 7
  %v826 = vsub.s32 %v45, %v825
  %v827 = vrot.slane %v795, %v826
  %v828 = vsel %vm680, %v803, %v799
  %v829 = vsel %vm682, %v807, %v828
  %v830 = vsel %vm684, %v811, %v829
  %v831 = vsel %vm686, %v815, %v830
  %v832 = vsel %vm688, %v819, %v831
  %v833 = vsel %vm690, %v823, %v832
  %v834 = vsel %vm692, %v827, %v833
  %v836 = vsel %vm695, %v834, 0.0
  %837 = vadd.xlane.f32.xlu0 %v836
  %v838 = vpop.xlane.xlu0 %837
  %v839 = vrcp.pop %v838
  %v841 = vlaneseq
  %v842 = vshrl.u32 %v841, 7
  %v843 = vsub.s32 0, %v842
  %v844 = vrot.slane %v839, %v843
  %v845 = vlaneseq
  %v846 = vshrl.u32 %v845, 7
  %v847 = vsub.s32 1, %v846
  %v848 = vrot.slane %v839, %v847
  %v849 = vlaneseq
  %v850 = vshrl.u32 %v849, 7
  %v851 = vsub.s32 2, %v850
  %v852 = vrot.slane %v839, %v851
  %v853 = vlaneseq
  %v854 = vshrl.u32 %v853, 7
  %v855 = vsub.s32 3, %v854
  %v856 = vrot.slane %v839, %v855
  %v857 = vlaneseq
  %v858 = vshrl.u32 %v857, 7
  %v859 = vsub.s32 4, %v858
  %v860 = vrot.slane %v839, %v859
  %v861 = vlaneseq
  %v862 = vshrl.u32 %v861, 7
  %v863 = vsub.s32 5, %v862
  %v864 = vrot.slane %v839, %v863
  %v865 = vlaneseq
  %v866 = vshrl.u32 %v865, 7
  %v867 = vsub.s32 6, %v866
  %v868 = vrot.slane %v839, %v867
  %v869 = vlaneseq
  %v870 = vshrl.u32 %v869, 7
  %v871 = vsub.s32 7, %v870
  %v872 = vrot.slane %v839, %v871
  %v881 = vmul.f32 %v749, %v844
  %v882 = vmul.f32 %v751, %v848
  %v883 = vmul.f32 %v753, %v852
  %v884 = vmul.f32 %v755, %v856
  %v885 = vmul.f32 %v757, %v860
  %v886 = vmul.f32 %v759, %v864
  %v887 = vmul.f32 %v761, %v868
  %v888 = vmul.f32 %v763, %v872
  %890 = vset.pattern.permute.xlu0 0
  %891 = vperm.xlu0 %890, %v881
  %v892 = vpop.permute.xlu0 %891
  %895 = vset.pattern.permute.xlu0 0
  %896 = vperm.xlu0 %895, %v882
  %v897 = vpop.permute.xlu0 %896
  %900 = vset.pattern.permute.xlu0 0
  %901 = vperm.xlu0 %900, %v883
  %v902 = vpop.permute.xlu0 %901
  %905 = vset.pattern.permute.xlu0 0
  %906 = vperm.xlu0 %905, %v884
  %v907 = vpop.permute.xlu0 %906
  %910 = vset.pattern.permute.xlu0 0
  %911 = vperm.xlu0 %910, %v885
  %v912 = vpop.permute.xlu0 %911
  %915 = vset.pattern.permute.xlu0 0
  %916 = vperm.xlu0 %915, %v886
  %v917 = vpop.permute.xlu0 %916
  %920 = vset.pattern.permute.xlu0 0
  %921 = vperm.xlu0 %920, %v887
  %v922 = vpop.permute.xlu0 %921
  %925 = vset.pattern.permute.xlu0 0
  %926 = vperm.xlu0 %925, %v888
  %v927 = vpop.permute.xlu0 %926
  %v929 = vmul.f32 %v892, %v186
  %v930 = vmul.f32 %v897, %v189
  %v931 = vmul.f32 %v902, %v194
  %v932 = vmul.f32 %v907, %v197
  %v933 = vmul.f32 %v912, %v202
  %v934 = vmul.f32 %v917, %v205
  %v935 = vmul.f32 %v922, %v210
  %v936 = vmul.f32 %v927, %v213
  %v937 = vsel %vm232, %v929, 0.0
  %v938 = vrot.slane %v937, 4
  %v939 = vadd.f32 %v937, %v938
  %v940 = vrot.slane %v939, 2
  %v941 = vadd.f32 %v939, %v940
  %v942 = vrot.slane %v941, 1
  %v943 = vadd.f32 %v941, %v942
  %v944 = vsel %vm232, %v930, 0.0
  %v945 = vrot.slane %v944, 4
  %v946 = vadd.f32 %v944, %v945
  %v947 = vrot.slane %v946, 2
  %v948 = vadd.f32 %v946, %v947
  %v949 = vrot.slane %v948, 1
  %v950 = vadd.f32 %v948, %v949
  %v951 = vsel %vm232, %v931, 0.0
  %v952 = vrot.slane %v951, 4
  %v953 = vadd.f32 %v951, %v952
  %v954 = vrot.slane %v953, 2
  %v955 = vadd.f32 %v953, %v954
  %v956 = vrot.slane %v955, 1
  %v957 = vadd.f32 %v955, %v956
  %v958 = vsel %vm232, %v932, 0.0
  %v959 = vrot.slane %v958, 4
  %v960 = vadd.f32 %v958, %v959
  %v961 = vrot.slane %v960, 2
  %v962 = vadd.f32 %v960, %v961
  %v963 = vrot.slane %v962, 1
  %v964 = vadd.f32 %v962, %v963
  %v965 = vsel %vm232, %v933, 0.0
  %v966 = vrot.slane %v965, 4
  %v967 = vadd.f32 %v965, %v966
  %v968 = vrot.slane %v967, 2
  %v969 = vadd.f32 %v967, %v968
  %v970 = vrot.slane %v969, 1
  %v971 = vadd.f32 %v969, %v970
  %v972 = vsel %vm232, %v934, 0.0
  %v973 = vrot.slane %v972, 4
  %v974 = vadd.f32 %v972, %v973
  %v975 = vrot.slane %v974, 2
  %v976 = vadd.f32 %v974, %v975
  %v977 = vrot.slane %v976, 1
  %v978 = vadd.f32 %v976, %v977
  %v979 = vsel %vm232, %v935, 0.0
  %v980 = vrot.slane %v979, 4
  %v981 = vadd.f32 %v979, %v980
  %v982 = vrot.slane %v981, 2
  %v983 = vadd.f32 %v981, %v982
  %v984 = vrot.slane %v983, 1
  %v985 = vadd.f32 %v983, %v984
  %v986 = vsel %vm232, %v936, 0.0
  %v987 = vrot.slane %v986, 4
  %v988 = vadd.f32 %v986, %v987
  %v989 = vrot.slane %v988, 2
  %v990 = vadd.f32 %v988, %v989
  %v991 = vrot.slane %v990, 1
  %v992 = vadd.f32 %v990, %v991
  %v994 = vlaneseq
  %v995 = vshrl.u32 %v994, 7
  %v996 = vsub.s32 0, %v995
  %v997 = vrot.slane %v40, %v996
  %999 = vbcast.lane.b32.xlu0 %v997, 256
  %v1000 = vpop.permute.xlu0 %999
  %v1001 = vlaneseq
  %v1002 = vshrl.u32 %v1001, 7
  %v1003 = vsub.s32 1, %v1002
  %v1004 = vrot.slane %v40, %v1003
  %1006 = vbcast.lane.b32.xlu0 %v1004, 256
  %v1007 = vpop.permute.xlu0 %1006
  %v1008 = vlaneseq
  %v1009 = vshrl.u32 %v1008, 7
  %v1010 = vsub.s32 2, %v1009
  %v1011 = vrot.slane %v40, %v1010
  %1013 = vbcast.lane.b32.xlu0 %v1011, 256
  %v1014 = vpop.permute.xlu0 %1013
  %v1015 = vlaneseq
  %v1016 = vshrl.u32 %v1015, 7
  %v1017 = vsub.s32 3, %v1016
  %v1018 = vrot.slane %v40, %v1017
  %1020 = vbcast.lane.b32.xlu0 %v1018, 256
  %v1021 = vpop.permute.xlu0 %1020
  %v1022 = vlaneseq
  %v1023 = vshrl.u32 %v1022, 7
  %v1024 = vsub.s32 4, %v1023
  %v1025 = vrot.slane %v40, %v1024
  %1027 = vbcast.lane.b32.xlu0 %v1025, 256
  %v1028 = vpop.permute.xlu0 %1027
  %v1029 = vlaneseq
  %v1030 = vshrl.u32 %v1029, 7
  %v1031 = vsub.s32 5, %v1030
  %v1032 = vrot.slane %v40, %v1031
  %1034 = vbcast.lane.b32.xlu0 %v1032, 256
  %v1035 = vpop.permute.xlu0 %1034
  %v1036 = vlaneseq
  %v1037 = vshrl.u32 %v1036, 7
  %v1038 = vsub.s32 6, %v1037
  %v1039 = vrot.slane %v40, %v1038
  %1041 = vbcast.lane.b32.xlu0 %v1039, 256
  %v1042 = vpop.permute.xlu0 %1041
  %v1043 = vlaneseq
  %v1044 = vshrl.u32 %v1043, 7
  %v1045 = vsub.s32 7, %v1044
  %v1046 = vrot.slane %v40, %v1045
  %1048 = vbcast.lane.b32.xlu0 %v1046, 256
  %v1049 = vpop.permute.xlu0 %1048
  %v1058 = vmul.f32 %v881, %v1000
  %v1059 = vmul.f32 %v882, %v1007
  %v1060 = vmul.f32 %v883, %v1014
  %v1061 = vmul.f32 %v884, %v1021
  %v1062 = vmul.f32 %v885, %v1028
  %v1063 = vmul.f32 %v886, %v1035
  %v1064 = vmul.f32 %v887, %v1042
  %v1065 = vmul.f32 %v888, %v1049
  %1074 = vset.pattern.permute.xlu0 0
  %1075 = vperm.xlu0 %1074, %v1058
  %v1076 = vpop.permute.xlu0 %1075
  %1077 = vset.pattern.permute.xlu0 0
  %1078 = vperm.xlu0 %1077, %v1059
  %v1079 = vpop.permute.xlu0 %1078
  %1080 = vset.pattern.permute.xlu0 0
  %1081 = vperm.xlu0 %1080, %v1060
  %v1082 = vpop.permute.xlu0 %1081
  %1083 = vset.pattern.permute.xlu0 0
  %1084 = vperm.xlu0 %1083, %v1061
  %v1085 = vpop.permute.xlu0 %1084
  %1086 = vset.pattern.permute.xlu0 0
  %1087 = vperm.xlu0 %1086, %v1062
  %v1088 = vpop.permute.xlu0 %1087
  %1089 = vset.pattern.permute.xlu0 0
  %1090 = vperm.xlu0 %1089, %v1063
  %v1091 = vpop.permute.xlu0 %1090
  %1092 = vset.pattern.permute.xlu0 0
  %1093 = vperm.xlu0 %1092, %v1064
  %v1094 = vpop.permute.xlu0 %1093
  %1095 = vset.pattern.permute.xlu0 0
  %1096 = vperm.xlu0 %1095, %v1065
  %v1097 = vpop.permute.xlu0 %1096
  %v1098 = vlaneseq
  %v1099 = vshrl.u32 %v1098, 7
  %v1100 = vsub.s32 %v45, %v1099
  %v1101 = vrot.slane %v1076, %v1100
  %v1102 = vlaneseq
  %v1103 = vshrl.u32 %v1102, 7
  %v1104 = vsub.s32 %v45, %v1103
  %v1105 = vrot.slane %v1079, %v1104
  %v1106 = vlaneseq
  %v1107 = vshrl.u32 %v1106, 7
  %v1108 = vsub.s32 %v45, %v1107
  %v1109 = vrot.slane %v1082, %v1108
  %v1110 = vlaneseq
  %v1111 = vshrl.u32 %v1110, 7
  %v1112 = vsub.s32 %v45, %v1111
  %v1113 = vrot.slane %v1085, %v1112
  %v1114 = vlaneseq
  %v1115 = vshrl.u32 %v1114, 7
  %v1116 = vsub.s32 %v45, %v1115
  %v1117 = vrot.slane %v1088, %v1116
  %v1118 = vlaneseq
  %v1119 = vshrl.u32 %v1118, 7
  %v1120 = vsub.s32 %v45, %v1119
  %v1121 = vrot.slane %v1091, %v1120
  %v1122 = vlaneseq
  %v1123 = vshrl.u32 %v1122, 7
  %v1124 = vsub.s32 %v45, %v1123
  %v1125 = vrot.slane %v1094, %v1124
  %v1126 = vlaneseq
  %v1127 = vshrl.u32 %v1126, 7
  %v1128 = vsub.s32 %v45, %v1127
  %v1129 = vrot.slane %v1097, %v1128
  %v1130 = vsel %vm680, %v1105, %v1101
  %v1131 = vsel %vm682, %v1109, %v1130
  %v1132 = vsel %vm684, %v1113, %v1131
  %v1133 = vsel %vm686, %v1117, %v1132
  %v1134 = vsel %vm688, %v1121, %v1133
  %v1135 = vsel %vm690, %v1125, %v1134
  %v1136 = vsel %vm692, %v1129, %v1135
  %v1138 = vsel %vm695, %v1136, 0.0
  %1139 = vadd.xlane.f32.xlu0 %v1138
  %v1140 = vpop.xlane.xlu0 %1139
  %v1141 = vpack.c.bf16 %v943, %v943
  %v1142 = vpack.c.bf16 %v950, %v950
  %v1143 = vpack.c.bf16 %v957, %v957
  %v1144 = vpack.c.bf16 %v964, %v964
  %v1145 = vpack.c.bf16 %v971, %v971
  %v1146 = vpack.c.bf16 %v978, %v978
  %v1147 = vpack.c.bf16 %v985, %v985
  %v1148 = vpack.c.bf16 %v992, %v992
  %v1149 = vld [vmem:[%s5] sm:$0xf]
  %v1150 = vld [vmem:[%s5 + $0x4] sm:$0xf]
  %v1151 = vld [vmem:[%s5 + $0x8] sm:$0xf]
  %v1152 = vld [vmem:[%s5 + $0xc] sm:$0xf]
  %v1153 = vmul.f32 %v1140, %v281
  %v1162 = vunpack.c.l.b16 %v1141
  %v1163 = vunpack.c.l.b16 %v1142
  %v1164 = vunpack.c.l.b16 %v1143
  %v1165 = vunpack.c.l.b16 %v1144
  %v1166 = vunpack.c.l.b16 %v1145
  %v1167 = vunpack.c.l.b16 %v1146
  %v1168 = vunpack.c.l.b16 %v1147
  %v1169 = vunpack.c.l.b16 %v1148
  %v1170 = vsel %vm680, %v1163, %v1162
  %v1171 = vsel %vm682, %v1164, %v1170
  %v1172 = vsel %vm684, %v1165, %v1171
  %v1173 = vsel %vm686, %v1166, %v1172
  %v1174 = vsel %vm688, %v1167, %v1173
  %v1175 = vsel %vm690, %v1168, %v1174
  %v1176 = vsel %vm692, %v1169, %v1175
  %v1177 = vpack.c.b16 %v1176, %v1176
  %v1182 = vunpack.c.l.b16 %v1149
  %v1183 = vunpack.c.l.b16 %v1150
  %v1184 = vunpack.c.l.b16 %v1151
  %v1185 = vunpack.c.l.b16 %v1152
  %v1186 = vpack.c.b16 %v1183, %v1182
  %v1187 = vpack.c.b16 %v1185, %v1184
  %v1191 = vsel %vm232, %v1177, 0
  %1193 = vmatprep.subr.bf16.mxu0 0
  %1194 = vmatpush1.bf16.msra.mxu0 %v1186
  %1195 = vmatprep.subr.bf16.mxu0 0
  %1196 = vmatpush1.bf16.msra.mxu0 %v1187
  %1197 = vmatprep.subr.bf16.mxu0 0
  %1198 = vmatpush1.bf16.msra.mxu0 0
  %1199 = vmatprep.subr.bf16.mxu0 0
  %1200 = vmatpush1.bf16.msra.mxu0 0
  %1201 = vmatprep.subr.bf16.mxu0 0
  %1202 = vmatpush1.bf16.msra.mxu0 0
  %1203 = vmatprep.subr.bf16.mxu0 0
  %1204 = vmatpush1.bf16.msra.mxu0 0
  %1205 = vmatprep.subr.bf16.mxu0 0
  %1206 = vmatpush1.bf16.msra.mxu0 0
  %1207 = vmatprep.subr.bf16.mxu0 0
  %1208 = vmatpush1.bf16.msra.mxu0 0
  %1209 = vmatprep.subr.bf16.mxu0 0
  %1210 = vmatpush1.bf16.msra.mxu0 0
  %1211 = vmatprep.subr.bf16.mxu0 0
  %1212 = vmatpush1.bf16.msra.mxu0 0
  %1213 = vmatprep.subr.bf16.mxu0 0
  %1214 = vmatpush1.bf16.msra.mxu0 0
  %1215 = vmatprep.subr.bf16.mxu0 0
  %1216 = vmatpush1.bf16.msra.mxu0 0
  %1217 = vmatprep.subr.bf16.mxu0 0
  %1218 = vmatpush1.bf16.msra.mxu0 0
  %1219 = vmatprep.subr.bf16.mxu0 0
  %1220 = vmatpush1.bf16.msra.mxu0 0
  %1221 = vmatprep.subr.bf16.mxu0 0
  %1222 = vmatpush1.bf16.msra.mxu0 0
  %1223 = vmatprep.subr.bf16.mxu0 0
  %1224 = vmatpush1.bf16.msra.mxu0 0
  %1225 = vmatprep.mubr.bf16.mxu0 0
  %1226 = vmatmul.mubr.bf16.gmra.mrb[0].mxu0 %v1191
  %v1227 = vpop.f32.mrb[0].mxu0
  %v1228 = vadd.f32 %v1153, %v1227
  %v1229 = vpop.f32.mrb[0].mxu0
  %v1230 = vpop.f32.mrb[0].mxu0
  %v1231 = vpop.f32.mrb[0].mxu0
  %1232 = vdwg.mxu0
  %v1233 = vadd.f32 %v1228, %v292
  %1234 = vst.msk [vmem:[%s9] sm:$0xff] %vm232, %v1233
  // Predicated region
  $region38: #{attr_encoder_forward.1} parent=0 // pred_check
    _
  $region39: #{attr_encoder_forward.1} parent=0 // pred_check_branch
    %1236 = sbr.rel (0) target = $region41
  $region40: #{attr_encoder_forward.1} parent=0 // pred_region
    _
  $region41: #{attr_encoder_forward.1} parent=0 // pred_fallthru
    _
  // Predicated region
  $region42: #{attr_encoder_forward.1} parent=0 // pred_check
    _
  $region43: #{attr_encoder_forward.1} parent=0 // pred_check_branch
    %1238 = sbr.rel (0) target = $region45
  $region44: #{attr_encoder_forward.1} parent=0 // pred_region
    _
  $region45: #{attr_encoder_forward.1} parent=0 // pred_fallthru
    _

</llo_original>
